<compile_context>
chip_gen: v6e
topology: v6e:2x2x1
jax: 0.10.0
libtpu: 0.0.40
codegen_flags: <defaults>
</compile_context>

<pallas_src>
import jax
import jax.numpy as jnp
from jax.experimental import pallas as pl
from jax.experimental.pallas import tpu as pltpu


def _ca_kernel(logits_ref, labels_ref, skel_ref, acc_ref):
    # grid = (batch, spatial_splits, spatial_tiles); last axis is the reduction.
    j = pl.program_id(2)

    @pl.when(j == 0)
    def _():
        acc_ref[...] = jnp.zeros_like(acc_ref)

    _, C, R, L = logits_ref.shape
    r_acc = acc_ref.shape[2]
    groups = R // r_acc

    lab = labels_ref[0, 0].astype(jnp.int32)      # (R, 128)
    skl = skel_ref[0, 0].astype(jnp.float32)      # (R, 128)

    # per-channel slabs, cast post-DMA (logits travel HBM->VMEM in native dtype)
    x = [logits_ref[0, c].astype(jnp.float32) for c in range(C)]   # C x (R, 128)

    # numerically-stable softmax over the channel axis (pure VPU, no XLU)
    m = x[0]
    for c in range(1, C):
        m = jnp.maximum(m, x[c])
    e = [jnp.exp(x[c] - m) for c in range(C)]
    s = e[0]
    for c in range(1, C):
        s = s + e[c]

    # EUP vrcp + one Newton step (keeps full f32 accuracy, frees VALU cycles)
    inv_s = pl.reciprocal(s, approx=True)
    inv_s = inv_s * (2.0 - s * inv_s)

    def fold(a):
        # (R, 128) -> (r_acc, 128): sum vreg-aligned groups of r_acc sublanes
        if groups == 1:
            return a
        return a.reshape(groups, r_acc, L).sum(axis=0)

    x_t = jnp.zeros_like(m)                       # x[target], built per channel
    for c in range(C):
        sel = lab == c                            # bool (R, 128), no iota needed
        sm_c = e[c] * inv_s                       # softmax channel c
        x_t = x_t + jnp.where(sel, x[c], 0.0)
        acc_ref[0, c] += fold(jnp.where(sel, sm_c, 0.0))      # tp partials
        acc_ref[0, C + c] += fold(sm_c)                       # sum(softmax)
        acc_ref[0, 2 * C + c] += fold(sel.astype(jnp.float32))  # sum(onehot)

    # per-pixel cross-entropy: nll = (m + log s) - x[target], weighted by skel
    nll = (m + jnp.log(s)) - x_t
    acc_ref[0, 3 * C] += fold(nll * skl)          # ce*skel partials


def _vmem_capacity_bytes():
    try:
        info = pltpu.get_tpu_info()
        cap = getattr(info, "vmem_capacity_bytes", None)
        if cap:
            return int(cap)
    except Exception:
        pass
    return 64 << 20   # conservative default (v7x per-TensorCore)


def ca_loss(net_output, target, skel, *, batch_dice=False, do_bg=True,
            alpha=0.1, beta=0.9, weight=1.0, smooth=1.0,
            tile_rows=512, spatial_splits=None):
    """CA_loss forward: TverskyLoss(softmax(x), target) + weight * mean(CE(x, target) * skel)."""
    B, C, X, Y = net_output.shape
    N = X * Y
    # TODO(synk): spatial size must be a multiple of 128; no ragged-tail handling.
    assert N % 128 == 0, "X*Y must be a multiple of 128"
    NR = N // 128

    logit_itemsize = jnp.dtype(net_output.dtype).itemsize

    # --- generation-aware VMEM budget & tile selection -----------------------
    vmem_cap = _vmem_capacity_bytes()
    budget = int(vmem_cap * 0.6)

    def _step_bytes(rows):
        dma = 2 * (C * logit_itemsize + 4 + 4) * 128     # double-buffered inputs / row
        tmp = (2 * C + 8) * 4 * 128                      # f32 in-kernel temporaries / row
        return (dma + tmp) * rows

    cands_all = [d for d in range(8, NR + 1, 8) if NR % d == 0]
    if not cands_all:
        R = NR                                           # tiny spatial extent
    else:
        fitting = [d for d in cands_all
                   if d <= max(tile_rows, 8) and _step_bytes(d) <= budget]
        R = max(fitting) if fitting else min(cands_all)

    tiles_total = NR // R
    # keep both TensorCores busy (v7x) when the batch can't be split 2-ways
    if B % 2 == 1 and tiles_total % 2 == 1 and R >= 64 and (R // 2) % 8 == 0:
        R //= 2
        tiles_total = NR // R

    if spatial_splits is None:
        spatial_splits = 2 if (B % 2 == 1 and tiles_total % 2 == 0) else 1
    assert tiles_total % spatial_splits == 0
    inner = tiles_total // spatial_splits

    r_acc = 8 if R % 8 == 0 else R
    n_rows = 3 * C + 1

    # labels as int8 when the block tiling allows it (int8 tile needs R % 32 == 0)
    use_int8 = (R % 32 == 0) and (C <= 127)
    lab_dtype = jnp.int8 if use_int8 else jnp.int32
    lab_bytes = 1 if use_int8 else 4

    logits = net_output.reshape(B, C, NR, 128)            # native dtype, cast in-kernel
    labels = target.reshape(B, 1, NR, 128).astype(lab_dtype)
    skel_r = skel.reshape(B, 1, NR, 128).astype(jnp.float32)

    out_block_bytes = n_rows * r_acc * 128 * 4
    working = _step_bytes(R) + 2 * out_block_bytes
    vmem_limit = max(32 << 20, int(2.5 * working) + (4 << 20))
    vmem_limit = min(vmem_limit, max(int(0.8 * vmem_cap), working + (8 << 20)))

    grid = (B, spatial_splits, inner)

    bytes_accessed = (B * C * N * logit_itemsize + B * N * (lab_bytes + 4)
                      + B * spatial_splits * out_block_bytes)
    cost = pl.CostEstimate(flops=int(B * N * (12 * C + 10)),
                           transcendentals=int(B * N * (C + 2)),
                           bytes_accessed=int(bytes_accessed))

    acc = pl.pallas_call(
        _ca_kernel,
        out_shape=jax.ShapeDtypeStruct((B * spatial_splits, n_rows, r_acc, 128),
                                       jnp.float32),
        grid_spec=pltpu.PrefetchScalarGridSpec(
            num_scalar_prefetch=0,
            grid=grid,
            in_specs=[
                pl.BlockSpec((1, C, R, 128), lambda b, p, j: (b, 0, p * inner + j, 0)),
                pl.BlockSpec((1, 1, R, 128), lambda b, p, j: (b, 0, p * inner + j, 0)),
                pl.BlockSpec((1, 1, R, 128), lambda b, p, j: (b, 0, p * inner + j, 0)),
            ],
            out_specs=pl.BlockSpec((1, n_rows, r_acc, 128),
                                   lambda b, p, j: (b * spatial_splits + p, 0, 0, 0)),
        ),
        compiler_params=pltpu.CompilerParams(
            dimension_semantics=("parallel", "parallel", "arbitrary"),
            vmem_limit_bytes=int(vmem_limit)),
        cost_estimate=cost,
    )(logits, labels, skel_r)

    # tiny final reduce + algebra in plain JAX (a few KiB)
    sums = acc.reshape(B, spatial_splits, n_rows, r_acc * 128).sum(axis=(1, 3))  # (B, 3C+1)
    tp = sums[:, 0:C]
    fp = sums[:, C:2 * C] - tp
    fn = sums[:, 2 * C:3 * C] - tp
    ce_skel_mean = jnp.sum(sums[:, 3 * C]) / (B * N)

    if batch_dice:
        tp = tp.sum(axis=0)
        fp = fp.sum(axis=0)
        fn = fn.sum(axis=0)

    tversky = (tp + smooth) / (tp + alpha * fp + beta * fn + smooth)
    if not do_bg:
        tversky = tversky[1:] if batch_dice else tversky[:, 1:]
    tversky_loss = -jnp.mean(tversky)

    return tversky_loss + weight * ce_skel_mean


def _ref_ca_loss(net_output, target, skel, *, batch_dice=False, do_bg=True,
                 alpha=0.1, beta=0.9, weight=1.0, smooth=1.0):
    """Pure-JAX reference of the PyTorch CA_loss forward."""
    labels = target[:, 0].astype(jnp.int32)                     # (B, X, Y)
    logp = jax.nn.log_softmax(net_output.astype(jnp.float32), axis=1)
    nll = -jnp.take_along_axis(logp, labels[:, None], axis=1)[:, 0]
    ce = jnp.mean(nll * skel)

    sm = jax.nn.softmax(net_output.astype(jnp.float32), axis=1)
    onehot = jax.nn.one_hot(labels, net_output.shape[1], axis=1)
    axes = (0, 2, 3) if batch_dice else (2, 3)
    tp = jnp.sum(sm * onehot, axis=axes)
    fp = jnp.sum(sm * (1.0 - onehot), axis=axes)
    fn = jnp.sum((1.0 - sm) * onehot, axis=axes)
    tversky = (tp + smooth) / (tp + alpha * fp + beta * fn + smooth)
    if not do_bg:
        tversky = tversky[1:] if batch_dice else tversky[:, 1:]
    return -jnp.mean(tversky) + weight * ce


if __name__ == "__main__":
    key = jax.random.PRNGKey(0)

    # --- check 1: small shape consistent with the module (B=2, C=4, 16x16) ---
    B, C, X, Y = 2, 4, 16, 16
    k1, k2, k3, key = jax.random.split(key, 4)
    net_output = jax.random.normal(k1, (B, C, X, Y), dtype=jnp.float32)
    target = jax.random.randint(k2, (B, 1, X, Y), 0, C, dtype=jnp.int32)
    skel = jax.random.uniform(k3, (B, X, Y), dtype=jnp.float32)

    loss = ca_loss(net_output, target, skel, batch_dice=False, do_bg=True,
                   alpha=0.1, beta=0.9, weight=1.0)
    loss = jax.block_until_ready(loss)
    ref = _ref_ca_loss(net_output, target, skel, batch_dice=False, do_bg=True,
                       alpha=0.1, beta=0.9, weight=1.0)
    assert jnp.allclose(loss, ref, rtol=1e-4, atol=1e-5), (loss, ref)

    # --- check 2: exercises default tile selection, multi-tile accumulation,
    #     sublane folding, int8 labels, spatial splits (B=1) and do_bg=False ---
    B2, C2, X2, Y2 = 1, 4, 64, 128
    k4, k5, k6, key = jax.random.split(key, 4)
    net_output2 = jax.random.normal(k4, (B2, C2, X2, Y2), dtype=jnp.float32)
    target2 = jax.random.randint(k5, (B2, 1, X2, Y2), 0, C2, dtype=jnp.int32)
    skel2 = jax.random.uniform(k6, (B2, X2, Y2), dtype=jnp.float32)

    loss2 = ca_loss(net_output2, target2, skel2, batch_dice=False, do_bg=False,
                    alpha=0.1, beta=0.9, weight=0.5)
    loss2 = jax.block_until_ready(loss2)
    ref2 = _ref_ca_loss(net_output2, target2, skel2, batch_dice=False, do_bg=False,
                        alpha=0.1, beta=0.9, weight=0.5)
    assert jnp.allclose(loss2, ref2, rtol=1e-4, atol=1e-5), (loss2, ref2)

    print("KERNEL_OK")
</pallas_src>

<mosaic_0001>
module attributes {stable_mosaic.version = 11 : i64} {
  func.func @_ca_kernel(%arg0: i32, %arg1: i32, %arg2: i32, %arg3: memref<1x4x2x128xf32, #tpu.memory_space<vmem>>, %arg4: memref<1x1x2x128xi32, #tpu.memory_space<vmem>>, %arg5: memref<1x1x2x128xf32, #tpu.memory_space<vmem>>, %arg6: memref<1x13x2x128xf32, #tpu.memory_space<vmem>>) attributes {dimension_semantics = [#tpu.dimension_semantics<parallel>, #tpu.dimension_semantics<parallel>, #tpu.dimension_semantics<arbitrary>], iteration_bounds = array<i64: 2, 1, 1>, scalar_prefetch = 0 : i64, scratch_operands = 0 : i64, tpu.core_type = #tpu.core_type<tc>, window_params = [{transform_indices = @transform_0, window_bounds = array<i64: 1, 4, 2, 128>}, {transform_indices = @transform_1, window_bounds = array<i64: 1, 1, 2, 128>}, {transform_indices = @transform_2, window_bounds = array<i64: 1, 1, 2, 128>}, {transform_indices = @transform_3, window_bounds = array<i64: 1, 13, 2, 128>}]} {
    %c0_i32 = arith.constant 0 : i32
    %0 = arith.cmpi eq, %arg2, %c0_i32 : i32
    %1 = arith.extui %0 : i1 to i32
    %c0_i32_0 = arith.constant 0 : i32
    %2 = arith.cmpi ne, %1, %c0_i32_0 : i32
    scf.if %2 {
      %cst_126 = arith.constant 0.000000e+00 : f32
      %157 = vector.broadcast %cst_126 : f32 to vector<1x13x2x128xf32>
      %c0_127 = arith.constant 0 : index
      %c0_128 = arith.constant 0 : index
      %c0_129 = arith.constant 0 : index
      %c0_130 = arith.constant 0 : index
      %158 = vector.load %arg6[%c0_127, %c0_128, %c0_129, %c0_130] : memref<1x13x2x128xf32, #tpu.memory_space<vmem>>, vector<1x13x2x128xf32>
      tpu.vector_store %arg6[%c0_127, %c0_128, %c0_129, %c0_130], %157 {strides = array<i32>} : memref<1x13x2x128xf32, #tpu.memory_space<vmem>>, vector<1x13x2x128xf32>,
    } else {
    }
    %c0 = arith.constant 0 : index
    %c0_1 = arith.constant 0 : index
    %c0_2 = arith.constant 0 : index
    %c0_3 = arith.constant 0 : index
    %3 = vector.load %arg4[%c0, %c0_1, %c0_2, %c0_3] : memref<1x1x2x128xi32, #tpu.memory_space<vmem>>, vector<1x1x2x128xi32>
    %4 = vector.shape_cast %3 : vector<1x1x2x128xi32> to vector<2x128xi32>
    %c0_4 = arith.constant 0 : index
    %c0_5 = arith.constant 0 : index
    %c0_6 = arith.constant 0 : index
    %c0_7 = arith.constant 0 : index
    %5 = vector.load %arg5[%c0_4, %c0_5, %c0_6, %c0_7] : memref<1x1x2x128xf32, #tpu.memory_space<vmem>>, vector<1x1x2x128xf32>
    %6 = vector.shape_cast %5 : vector<1x1x2x128xf32> to vector<2x128xf32>
    %c0_8 = arith.constant 0 : index
    %c0_9 = arith.constant 0 : index
    %c0_10 = arith.constant 0 : index
    %c0_11 = arith.constant 0 : index
    %7 = vector.load %arg3[%c0_8, %c0_9, %c0_10, %c0_11] : memref<1x4x2x128xf32, #tpu.memory_space<vmem>>, vector<1x1x2x128xf32>
    %8 = vector.shape_cast %7 : vector<1x1x2x128xf32> to vector<2x128xf32>
    %c0_12 = arith.constant 0 : index
    %c1 = arith.constant 1 : index
    %c0_13 = arith.constant 0 : index
    %c0_14 = arith.constant 0 : index
    %9 = vector.load %arg3[%c0_12, %c1, %c0_13, %c0_14] : memref<1x4x2x128xf32, #tpu.memory_space<vmem>>, vector<1x1x2x128xf32>
    %10 = vector.shape_cast %9 : vector<1x1x2x128xf32> to vector<2x128xf32>
    %c0_15 = arith.constant 0 : index
    %c2 = arith.constant 2 : index
    %c0_16 = arith.constant 0 : index
    %c0_17 = arith.constant 0 : index
    %11 = vector.load %arg3[%c0_15, %c2, %c0_16, %c0_17] : memref<1x4x2x128xf32, #tpu.memory_space<vmem>>, vector<1x1x2x128xf32>
    %12 = vector.shape_cast %11 : vector<1x1x2x128xf32> to vector<2x128xf32>
    %c0_18 = arith.constant 0 : index
    %c3 = arith.constant 3 : index
    %c0_19 = arith.constant 0 : index
    %c0_20 = arith.constant 0 : index
    %13 = vector.load %arg3[%c0_18, %c3, %c0_19, %c0_20] : memref<1x4x2x128xf32, #tpu.memory_space<vmem>>, vector<1x1x2x128xf32>
    %14 = vector.shape_cast %13 : vector<1x1x2x128xf32> to vector<2x128xf32>
    %15 = arith.maximumf %8, %10 : vector<2x128xf32>
    %16 = arith.maximumf %15, %12 : vector<2x128xf32>
    %17 = arith.maximumf %16, %14 : vector<2x128xf32>
    %18 = arith.subf %8, %17 : vector<2x128xf32>
    %19 = math.exp %18 : vector<2x128xf32>
    %20 = arith.subf %10, %17 : vector<2x128xf32>
    %21 = math.exp %20 : vector<2x128xf32>
    %22 = arith.subf %12, %17 : vector<2x128xf32>
    %23 = math.exp %22 : vector<2x128xf32>
    %24 = arith.subf %14, %17 : vector<2x128xf32>
    %25 = math.exp %24 : vector<2x128xf32>
    %26 = arith.addf %19, %21 : vector<2x128xf32>
    %27 = arith.addf %26, %23 : vector<2x128xf32>
    %28 = arith.addf %27, %25 : vector<2x128xf32>
    %29 = tpu.reciprocal %28 {approx = true} : vector<2x128xf32> -> vector<2x128xf32>
    %30 = arith.mulf %28, %29 : vector<2x128xf32>
    %cst = arith.constant 2.000000e+00 : f32
    %31 = vector.broadcast %cst : f32 to vector<2x128xf32>
    %32 = arith.subf %31, %30 : vector<2x128xf32>
    %33 = arith.mulf %29, %32 : vector<2x128xf32>
    %cst_21 = arith.constant 0.000000e+00 : f32
    %34 = vector.broadcast %cst_21 : f32 to vector<2x128xf32>
    %c0_i32_22 = arith.constant 0 : i32
    %35 = vector.broadcast %c0_i32_22 : i32 to vector<2x128xi32>
    %36 = arith.cmpi eq, %4, %35 : vector<2x128xi32>
    %37 = arith.mulf %19, %33 : vector<2x128xf32>
    %cst_23 = arith.constant 0.000000e+00 : f32
    %38 = vector.broadcast %cst_23 : f32 to vector<2x128xf32>
    %39 = arith.select %36, %8, %38 : vector<2x128xi1>, vector<2x128xf32>
    %40 = arith.addf %34, %39 : vector<2x128xf32>
    %c0_24 = arith.constant 0 : index
    %c0_25 = arith.constant 0 : index
    %c0_26 = arith.constant 0 : index
    %c0_27 = arith.constant 0 : index
    %41 = vector.load %arg6[%c0_24, %c0_25, %c0_26, %c0_27] : memref<1x13x2x128xf32, #tpu.memory_space<vmem>>, vector<1x1x2x128xf32>
    %42 = vector.shape_cast %41 : vector<1x1x2x128xf32> to vector<2x128xf32>
    %cst_28 = arith.constant 0.000000e+00 : f32
    %43 = vector.broadcast %cst_28 : f32 to vector<2x128xf32>
    %44 = arith.select %36, %37, %43 : vector<2x128xi1>, vector<2x128xf32>
    %45 = arith.addf %42, %44 : vector<2x128xf32>
    %c0_29 = arith.constant 0 : index
    %c0_30 = arith.constant 0 : index
    %c0_31 = arith.constant 0 : index
    %c0_32 = arith.constant 0 : index
    %46 = vector.load %arg6[%c0_29, %c0_30, %c0_31, %c0_32] : memref<1x13x2x128xf32, #tpu.memory_space<vmem>>, vector<1x1x2x128xf32>
    %47 = vector.shape_cast %46 : vector<1x1x2x128xf32> to vector<2x128xf32>
    %48 = vector.shape_cast %45 : vector<2x128xf32> to vector<1x1x2x128xf32>
    tpu.vector_store %arg6[%c0_29, %c0_30, %c0_31, %c0_32], %48 {strides = array<i32>} : memref<1x13x2x128xf32, #tpu.memory_space<vmem>>, vector<1x1x2x128xf32>,
    %c0_33 = arith.constant 0 : index
    %c4 = arith.constant 4 : index
    %c0_34 = arith.constant 0 : index
    %c0_35 = arith.constant 0 : index
    %49 = vector.load %arg6[%c0_33, %c4, %c0_34, %c0_35] : memref<1x13x2x128xf32, #tpu.memory_space<vmem>>, vector<1x1x2x128xf32>
    %50 = vector.shape_cast %49 : vector<1x1x2x128xf32> to vector<2x128xf32>
    %51 = arith.addf %50, %37 : vector<2x128xf32>
    %c0_36 = arith.constant 0 : index
    %c4_37 = arith.constant 4 : index
    %c0_38 = arith.constant 0 : index
    %c0_39 = arith.constant 0 : index
    %52 = vector.load %arg6[%c0_36, %c4_37, %c0_38, %c0_39] : memref<1x13x2x128xf32, #tpu.memory_space<vmem>>, vector<1x1x2x128xf32>
    %53 = vector.shape_cast %52 : vector<1x1x2x128xf32> to vector<2x128xf32>
    %54 = vector.shape_cast %51 : vector<2x128xf32> to vector<1x1x2x128xf32>
    tpu.vector_store %arg6[%c0_36, %c4_37, %c0_38, %c0_39], %54 {strides = array<i32>} : memref<1x13x2x128xf32, #tpu.memory_space<vmem>>, vector<1x1x2x128xf32>,
    %c0_40 = arith.constant 0 : index
    %c8 = arith.constant 8 : index
    %c0_41 = arith.constant 0 : index
    %c0_42 = arith.constant 0 : index
    %55 = vector.load %arg6[%c0_40, %c8, %c0_41, %c0_42] : memref<1x13x2x128xf32, #tpu.memory_space<vmem>>, vector<1x1x2x128xf32>
    %56 = vector.shape_cast %55 : vector<1x1x2x128xf32> to vector<2x128xf32>
    %57 = arith.extui %36 : vector<2x128xi1> to vector<2x128xi32>
    %58 = arith.sitofp %57 : vector<2x128xi32> to vector<2x128xf32>
    %59 = arith.addf %56, %58 : vector<2x128xf32>
    %c0_43 = arith.constant 0 : index
    %c8_44 = arith.constant 8 : index
    %c0_45 = arith.constant 0 : index
    %c0_46 = arith.constant 0 : index
    %60 = vector.load %arg6[%c0_43, %c8_44, %c0_45, %c0_46] : memref<1x13x2x128xf32, #tpu.memory_space<vmem>>, vector<1x1x2x128xf32>
    %61 = vector.shape_cast %60 : vector<1x1x2x128xf32> to vector<2x128xf32>
    %62 = vector.shape_cast %59 : vector<2x128xf32> to vector<1x1x2x128xf32>
    tpu.vector_store %arg6[%c0_43, %c8_44, %c0_45, %c0_46], %62 {strides = array<i32>} : memref<1x13x2x128xf32, #tpu.memory_space<vmem>>, vector<1x1x2x128xf32>,
    %c1_i32 = arith.constant 1 : i32
    %63 = vector.broadcast %c1_i32 : i32 to vector<2x128xi32>
    %64 = arith.cmpi eq, %4, %63 : vector<2x128xi32>
    %65 = arith.mulf %21, %33 : vector<2x128xf32>
    %cst_47 = arith.constant 0.000000e+00 : f32
    %66 = vector.broadcast %cst_47 : f32 to vector<2x128xf32>
    %67 = arith.select %64, %10, %66 : vector<2x128xi1>, vector<2x128xf32>
    %68 = arith.addf %40, %67 : vector<2x128xf32>
    %c0_48 = arith.constant 0 : index
    %c1_49 = arith.constant 1 : index
    %c0_50 = arith.constant 0 : index
    %c0_51 = arith.constant 0 : index
    %69 = vector.load %arg6[%c0_48, %c1_49, %c0_50, %c0_51] : memref<1x13x2x128xf32, #tpu.memory_space<vmem>>, vector<1x1x2x128xf32>
    %70 = vector.shape_cast %69 : vector<1x1x2x128xf32> to vector<2x128xf32>
    %cst_52 = arith.constant 0.000000e+00 : f32
    %71 = vector.broadcast %cst_52 : f32 to vector<2x128xf32>
    %72 = arith.select %64, %65, %71 : vector<2x128xi1>, vector<2x128xf32>
    %73 = arith.addf %70, %72 : vector<2x128xf32>
    %c0_53 = arith.constant 0 : index
    %c1_54 = arith.constant 1 : index
    %c0_55 = arith.constant 0 : index
    %c0_56 = arith.constant 0 : index
    %74 = vector.load %arg6[%c0_53, %c1_54, %c0_55, %c0_56] : memref<1x13x2x128xf32, #tpu.memory_space<vmem>>, vector<1x1x2x128xf32>
    %75 = vector.shape_cast %74 : vector<1x1x2x128xf32> to vector<2x128xf32>
    %76 = vector.shape_cast %73 : vector<2x128xf32> to vector<1x1x2x128xf32>
    tpu.vector_store %arg6[%c0_53, %c1_54, %c0_55, %c0_56], %76 {strides = array<i32>} : memref<1x13x2x128xf32, #tpu.memory_space<vmem>>, vector<1x1x2x128xf32>,
    %c0_57 = arith.constant 0 : index
    %c5 = arith.constant 5 : index
    %c0_58 = arith.constant 0 : index
    %c0_59 = arith.constant 0 : index
    %77 = vector.load %arg6[%c0_57, %c5, %c0_58, %c0_59] : memref<1x13x2x128xf32, #tpu.memory_space<vmem>>, vector<1x1x2x128xf32>
    %78 = vector.shape_cast %77 : vector<1x1x2x128xf32> to vector<2x128xf32>
    %79 = arith.addf %78, %65 : vector<2x128xf32>
    %c0_60 = arith.constant 0 : index
    %c5_61 = arith.constant 5 : index
    %c0_62 = arith.constant 0 : index
    %c0_63 = arith.constant 0 : index
    %80 = vector.load %arg6[%c0_60, %c5_61, %c0_62, %c0_63] : memref<1x13x2x128xf32, #tpu.memory_space<vmem>>, vector<1x1x2x128xf32>
    %81 = vector.shape_cast %80 : vector<1x1x2x128xf32> to vector<2x128xf32>
    %82 = vector.shape_cast %79 : vector<2x128xf32> to vector<1x1x2x128xf32>
    tpu.vector_store %arg6[%c0_60, %c5_61, %c0_62, %c0_63], %82 {strides = array<i32>} : memref<1x13x2x128xf32, #tpu.memory_space<vmem>>, vector<1x1x2x128xf32>,
    %c0_64 = arith.constant 0 : index
    %c9 = arith.constant 9 : index
    %c0_65 = arith.constant 0 : index
    %c0_66 = arith.constant 0 : index
    %83 = vector.load %arg6[%c0_64, %c9, %c0_65, %c0_66] : memref<1x13x2x128xf32, #tpu.memory_space<vmem>>, vector<1x1x2x128xf32>
    %84 = vector.shape_cast %83 : vector<1x1x2x128xf32> to vector<2x128xf32>
    %85 = arith.extui %64 : vector<2x128xi1> to vector<2x128xi32>
    %86 = arith.sitofp %85 : vector<2x128xi32> to vector<2x128xf32>
    %87 = arith.addf %84, %86 : vector<2x128xf32>
    %c0_67 = arith.constant 0 : index
    %c9_68 = arith.constant 9 : index
    %c0_69 = arith.constant 0 : index
    %c0_70 = arith.constant 0 : index
    %88 = vector.load %arg6[%c0_67, %c9_68, %c0_69, %c0_70] : memref<1x13x2x128xf32, #tpu.memory_space<vmem>>, vector<1x1x2x128xf32>
    %89 = vector.shape_cast %88 : vector<1x1x2x128xf32> to vector<2x128xf32>
    %90 = vector.shape_cast %87 : vector<2x128xf32> to vector<1x1x2x128xf32>
    tpu.vector_store %arg6[%c0_67, %c9_68, %c0_69, %c0_70], %90 {strides = array<i32>} : memref<1x13x2x128xf32, #tpu.memory_space<vmem>>, vector<1x1x2x128xf32>,
    %c2_i32 = arith.constant 2 : i32
    %91 = vector.broadcast %c2_i32 : i32 to vector<2x128xi32>
    %92 = arith.cmpi eq, %4, %91 : vector<2x128xi32>
    %93 = arith.mulf %23, %33 : vector<2x128xf32>
    %cst_71 = arith.constant 0.000000e+00 : f32
    %94 = vector.broadcast %cst_71 : f32 to vector<2x128xf32>
    %95 = arith.select %92, %12, %94 : vector<2x128xi1>, vector<2x128xf32>
    %96 = arith.addf %68, %95 : vector<2x128xf32>
    %c0_72 = arith.constant 0 : index
    %c2_73 = arith.constant 2 : index
    %c0_74 = arith.constant 0 : index
    %c0_75 = arith.constant 0 : index
    %97 = vector.load %arg6[%c0_72, %c2_73, %c0_74, %c0_75] : memref<1x13x2x128xf32, #tpu.memory_space<vmem>>, vector<1x1x2x128xf32>
    %98 = vector.shape_cast %97 : vector<1x1x2x128xf32> to vector<2x128xf32>
    %cst_76 = arith.constant 0.000000e+00 : f32
    %99 = vector.broadcast %cst_76 : f32 to vector<2x128xf32>
    %100 = arith.select %92, %93, %99 : vector<2x128xi1>, vector<2x128xf32>
    %101 = arith.addf %98, %100 : vector<2x128xf32>
    %c0_77 = arith.constant 0 : index
    %c2_78 = arith.constant 2 : index
    %c0_79 = arith.constant 0 : index
    %c0_80 = arith.constant 0 : index
    %102 = vector.load %arg6[%c0_77, %c2_78, %c0_79, %c0_80] : memref<1x13x2x128xf32, #tpu.memory_space<vmem>>, vector<1x1x2x128xf32>
    %103 = vector.shape_cast %102 : vector<1x1x2x128xf32> to vector<2x128xf32>
    %104 = vector.shape_cast %101 : vector<2x128xf32> to vector<1x1x2x128xf32>
    tpu.vector_store %arg6[%c0_77, %c2_78, %c0_79, %c0_80], %104 {strides = array<i32>} : memref<1x13x2x128xf32, #tpu.memory_space<vmem>>, vector<1x1x2x128xf32>,
    %c0_81 = arith.constant 0 : index
    %c6 = arith.constant 6 : index
    %c0_82 = arith.constant 0 : index
    %c0_83 = arith.constant 0 : index
    %105 = vector.load %arg6[%c0_81, %c6, %c0_82, %c0_83] : memref<1x13x2x128xf32, #tpu.memory_space<vmem>>, vector<1x1x2x128xf32>
    %106 = vector.shape_cast %105 : vector<1x1x2x128xf32> to vector<2x128xf32>
    %107 = arith.addf %106, %93 : vector<2x128xf32>
    %c0_84 = arith.constant 0 : index
    %c6_85 = arith.constant 6 : index
    %c0_86 = arith.constant 0 : index
    %c0_87 = arith.constant 0 : index
    %108 = vector.load %arg6[%c0_84, %c6_85, %c0_86, %c0_87] : memref<1x13x2x128xf32, #tpu.memory_space<vmem>>, vector<1x1x2x128xf32>
    %109 = vector.shape_cast %108 : vector<1x1x2x128xf32> to vector<2x128xf32>
    %110 = vector.shape_cast %107 : vector<2x128xf32> to vector<1x1x2x128xf32>
    tpu.vector_store %arg6[%c0_84, %c6_85, %c0_86, %c0_87], %110 {strides = array<i32>} : memref<1x13x2x128xf32, #tpu.memory_space<vmem>>, vector<1x1x2x128xf32>,
    %c0_88 = arith.constant 0 : index
    %c10 = arith.constant 10 : index
    %c0_89 = arith.constant 0 : index
    %c0_90 = arith.constant 0 : index
    %111 = vector.load %arg6[%c0_88, %c10, %c0_89, %c0_90] : memref<1x13x2x128xf32, #tpu.memory_space<vmem>>, vector<1x1x2x128xf32>
    %112 = vector.shape_cast %111 : vector<1x1x2x128xf32> to vector<2x128xf32>
    %113 = arith.extui %92 : vector<2x128xi1> to vector<2x128xi32>
    %114 = arith.sitofp %113 : vector<2x128xi32> to vector<2x128xf32>
    %115 = arith.addf %112, %114 : vector<2x128xf32>
    %c0_91 = arith.constant 0 : index
    %c10_92 = arith.constant 10 : index
    %c0_93 = arith.constant 0 : index
    %c0_94 = arith.constant 0 : index
    %116 = vector.load %arg6[%c0_91, %c10_92, %c0_93, %c0_94] : memref<1x13x2x128xf32, #tpu.memory_space<vmem>>, vector<1x1x2x128xf32>
    %117 = vector.shape_cast %116 : vector<1x1x2x128xf32> to vector<2x128xf32>
    %118 = vector.shape_cast %115 : vector<2x128xf32> to vector<1x1x2x128xf32>
    tpu.vector_store %arg6[%c0_91, %c10_92, %c0_93, %c0_94], %118 {strides = array<i32>} : memref<1x13x2x128xf32, #tpu.memory_space<vmem>>, vector<1x1x2x128xf32>,
    %c3_i32 = arith.constant 3 : i32
    %119 = vector.broadcast %c3_i32 : i32 to vector<2x128xi32>
    %120 = arith.cmpi eq, %4, %119 : vector<2x128xi32>
    %121 = arith.mulf %25, %33 : vector<2x128xf32>
    %cst_95 = arith.constant 0.000000e+00 : f32
    %122 = vector.broadcast %cst_95 : f32 to vector<2x128xf32>
    %123 = arith.select %120, %14, %122 : vector<2x128xi1>, vector<2x128xf32>
    %124 = arith.addf %96, %123 : vector<2x128xf32>
    %c0_96 = arith.constant 0 : index
    %c3_97 = arith.constant 3 : index
    %c0_98 = arith.constant 0 : index
    %c0_99 = arith.constant 0 : index
    %125 = vector.load %arg6[%c0_96, %c3_97, %c0_98, %c0_99] : memref<1x13x2x128xf32, #tpu.memory_space<vmem>>, vector<1x1x2x128xf32>
    %126 = vector.shape_cast %125 : vector<1x1x2x128xf32> to vector<2x128xf32>
    %cst_100 = arith.constant 0.000000e+00 : f32
    %127 = vector.broadcast %cst_100 : f32 to vector<2x128xf32>
    %128 = arith.select %120, %121, %127 : vector<2x128xi1>, vector<2x128xf32>
    %129 = arith.addf %126, %128 : vector<2x128xf32>
    %c0_101 = arith.constant 0 : index
    %c3_102 = arith.constant 3 : index
    %c0_103 = arith.constant 0 : index
    %c0_104 = arith.constant 0 : index
    %130 = vector.load %arg6[%c0_101, %c3_102, %c0_103, %c0_104] : memref<1x13x2x128xf32, #tpu.memory_space<vmem>>, vector<1x1x2x128xf32>
    %131 = vector.shape_cast %130 : vector<1x1x2x128xf32> to vector<2x128xf32>
    %132 = vector.shape_cast %129 : vector<2x128xf32> to vector<1x1x2x128xf32>
    tpu.vector_store %arg6[%c0_101, %c3_102, %c0_103, %c0_104], %132 {strides = array<i32>} : memref<1x13x2x128xf32, #tpu.memory_space<vmem>>, vector<1x1x2x128xf32>,
    %c0_105 = arith.constant 0 : index
    %c7 = arith.constant 7 : index
    %c0_106 = arith.constant 0 : index
    %c0_107 = arith.constant 0 : index
    %133 = vector.load %arg6[%c0_105, %c7, %c0_106, %c0_107] : memref<1x13x2x128xf32, #tpu.memory_space<vmem>>, vector<1x1x2x128xf32>
    %134 = vector.shape_cast %133 : vector<1x1x2x128xf32> to vector<2x128xf32>
    %135 = arith.addf %134, %121 : vector<2x128xf32>
    %c0_108 = arith.constant 0 : index
    %c7_109 = arith.constant 7 : index
    %c0_110 = arith.constant 0 : index
    %c0_111 = arith.constant 0 : index
    %136 = vector.load %arg6[%c0_108, %c7_109, %c0_110, %c0_111] : memref<1x13x2x128xf32, #tpu.memory_space<vmem>>, vector<1x1x2x128xf32>
    %137 = vector.shape_cast %136 : vector<1x1x2x128xf32> to vector<2x128xf32>
    %138 = vector.shape_cast %135 : vector<2x128xf32> to vector<1x1x2x128xf32>
    tpu.vector_store %arg6[%c0_108, %c7_109, %c0_110, %c0_111], %138 {strides = array<i32>} : memref<1x13x2x128xf32, #tpu.memory_space<vmem>>, vector<1x1x2x128xf32>,
    %c0_112 = arith.constant 0 : index
    %c11 = arith.constant 11 : index
    %c0_113 = arith.constant 0 : index
    %c0_114 = arith.constant 0 : index
    %139 = vector.load %arg6[%c0_112, %c11, %c0_113, %c0_114] : memref<1x13x2x128xf32, #tpu.memory_space<vmem>>, vector<1x1x2x128xf32>
    %140 = vector.shape_cast %139 : vector<1x1x2x128xf32> to vector<2x128xf32>
    %141 = arith.extui %120 : vector<2x128xi1> to vector<2x128xi32>
    %142 = arith.sitofp %141 : vector<2x128xi32> to vector<2x128xf32>
    %143 = arith.addf %140, %142 : vector<2x128xf32>
    %c0_115 = arith.constant 0 : index
    %c11_116 = arith.constant 11 : index
    %c0_117 = arith.constant 0 : index
    %c0_118 = arith.constant 0 : index
    %144 = vector.load %arg6[%c0_115, %c11_116, %c0_117, %c0_118] : memref<1x13x2x128xf32, #tpu.memory_space<vmem>>, vector<1x1x2x128xf32>
    %145 = vector.shape_cast %144 : vector<1x1x2x128xf32> to vector<2x128xf32>
    %146 = vector.shape_cast %143 : vector<2x128xf32> to vector<1x1x2x128xf32>
    tpu.vector_store %arg6[%c0_115, %c11_116, %c0_117, %c0_118], %146 {strides = array<i32>} : memref<1x13x2x128xf32, #tpu.memory_space<vmem>>, vector<1x1x2x128xf32>,
    %147 = math.log %28 : vector<2x128xf32>
    %148 = arith.addf %17, %147 : vector<2x128xf32>
    %149 = arith.subf %148, %124 : vector<2x128xf32>
    %c0_119 = arith.constant 0 : index
    %c12 = arith.constant 12 : index
    %c0_120 = arith.constant 0 : index
    %c0_121 = arith.constant 0 : index
    %150 = vector.load %arg6[%c0_119, %c12, %c0_120, %c0_121] : memref<1x13x2x128xf32, #tpu.memory_space<vmem>>, vector<1x1x2x128xf32>
    %151 = vector.shape_cast %150 : vector<1x1x2x128xf32> to vector<2x128xf32>
    %152 = arith.mulf %149, %6 : vector<2x128xf32>
    %153 = arith.addf %151, %152 : vector<2x128xf32>
    %c0_122 = arith.constant 0 : index
    %c12_123 = arith.constant 12 : index
    %c0_124 = arith.constant 0 : index
    %c0_125 = arith.constant 0 : index
    %154 = vector.load %arg6[%c0_122, %c12_123, %c0_124, %c0_125] : memref<1x13x2x128xf32, #tpu.memory_space<vmem>>, vector<1x1x2x128xf32>
    %155 = vector.shape_cast %154 : vector<1x1x2x128xf32> to vector<2x128xf32>
    %156 = vector.shape_cast %153 : vector<2x128xf32> to vector<1x1x2x128xf32>
    tpu.vector_store %arg6[%c0_122, %c12_123, %c0_124, %c0_125], %156 {strides = array<i32>} : memref<1x13x2x128xf32, #tpu.memory_space<vmem>>, vector<1x1x2x128xf32>,
    return
  }
  func.func @transform_0(%arg0: i32, %arg1: i32, %arg2: i32) -> (i32, i32, i32, i32) {
    %c1_i32 = arith.constant 1 : i32
    %0 = arith.muli %arg1, %c1_i32 : i32
    %1 = arith.addi %0, %arg2 : i32
    %c0_i32 = arith.constant 0 : i32
    %c0_i32_0 = arith.constant 0 : i32
    %c0_i32_1 = arith.constant 0 : i32
    return %arg0, %c0_i32, %1, %c0_i32_0 : i32, i32, i32, i32
  }
  func.func @transform_1(%arg0: i32, %arg1: i32, %arg2: i32) -> (i32, i32, i32, i32) {
    %c1_i32 = arith.constant 1 : i32
    %0 = arith.muli %arg1, %c1_i32 : i32
    %1 = arith.addi %0, %arg2 : i32
    %c0_i32 = arith.constant 0 : i32
    %c0_i32_0 = arith.constant 0 : i32
    %c0_i32_1 = arith.constant 0 : i32
    return %arg0, %c0_i32, %1, %c0_i32_0 : i32, i32, i32, i32
  }
  func.func @transform_2(%arg0: i32, %arg1: i32, %arg2: i32) -> (i32, i32, i32, i32) {
    %c1_i32 = arith.constant 1 : i32
    %0 = arith.muli %arg1, %c1_i32 : i32
    %1 = arith.addi %0, %arg2 : i32
    %c0_i32 = arith.constant 0 : i32
    %c0_i32_0 = arith.constant 0 : i32
    %c0_i32_1 = arith.constant 0 : i32
    return %arg0, %c0_i32, %1, %c0_i32_0 : i32, i32, i32, i32
  }
  func.func @transform_3(%arg0: i32, %arg1: i32, %arg2: i32) -> (i32, i32, i32, i32) {
    %c1_i32 = arith.constant 1 : i32
    %0 = arith.muli %arg0, %c1_i32 : i32
    %1 = arith.addi %0, %arg1 : i32
    %c0_i32 = arith.constant 0 : i32
    %c0_i32_0 = arith.constant 0 : i32
    %c0_i32_1 = arith.constant 0 : i32
    %c0_i32_2 = arith.constant 0 : i32
    return %1, %c0_i32, %c0_i32_0, %c0_i32_1 : i32, i32, i32, i32
  }
}

</mosaic_0001>

<llo_original>
// kernel: tpu_custom_call.1
$region0: #{tpu_custom_call.1}
  #allocation0 [shape = 'u32[]', space=smem, size = 0x4, offset = 0x4, fixed_abs, tag = 'smem constant byte address 0x4 - core index']
  #allocation1 [shape = 'u32[144,128]{1,0:T(1,128)}', space=vmem, size = 0x12000, scoped, tag = 'internal scratch']
  %s0 = inlined_call_operand.hbm [shape: f32[2,4,2,128], index: 0, kind: input, shape index: {}]
  %s1 = inlined_call_operand.hbm [shape: s32[2,1,2,128], index: 1, kind: input, shape index: {}]
  %s2 = inlined_call_operand.hbm [shape: f32[2,1,2,128], index: 2, kind: input, shape index: {}]
  %s3 = inlined_call_operand.hbm [shape: f32[2,13,2,128], index: 3, kind: output, shape index: {}]
  %s4 = sld [smem:[#allocation0]]
  $region61: #{tpu_custom_call.1} parent=0
    _
  %s6 = ssub.s32 1, %s4
  %s7 = scalar_select 0, %s6, %s4
  $region1: #{tpu_custom_call.1} parent=0
    #allocation2 [shape = 'u8[8192]{0}', space=vmem, size = 0x2000, scoped, tag = 'input window, operand 0']
    #allocation3 [shape = 's32[2]{0}', space=sflag, size = 0x8, scoped, tag = 'scoped memory for tpu_custom_call.1']
    #allocation4 [shape = 's32[2]{0}', space=sflag, size = 0x8, scoped, tag = 'scoped memory for tpu_custom_call.1']
    #allocation5 [shape = 'u8[2048]{0}', space=vmem, size = 0x800, scoped, tag = 'input window, operand 1']
    #allocation6 [shape = 's32[2]{0}', space=sflag, size = 0x8, scoped, tag = 'scoped memory for tpu_custom_call.1']
    #allocation7 [shape = 'u8[2048]{0}', space=vmem, size = 0x800, scoped, tag = 'input window, operand 2']
    #allocation8 [shape = 'u8[26624]{0}', space=vmem, size = 0x6800, scoped, tag = 'output window, operand 0']
    %8 = vsyncpa [#allocation3], 0
    %s9 = scalar_lea.sflag [#allocation3], 1
    %10 = vsyncpa %s9, 0
    %11 = vsyncpa [#allocation6], 0
    %s12 = scalar_lea.sflag [#allocation6], 1
    %13 = vsyncpa %s12, 0
    %14 = vsyncpa [#allocation4], 0
    %s15 = scalar_lea.sflag [#allocation4], 1
    %16 = vsyncpa %s15, 0
    loop: start=0, step=1, limit=4
    $region2: #{tpu_custom_call.1} parent=1 // loop_pre_header
      _
    $region3: #{tpu_custom_call.1} parent=1 // loop_header
      %s18 = sphi 0, %s22
      %p19 = scmp.ge.s32.totalorder %s18, 4
      %s25 = sphi 0, %s44
      %s26 = sphi 0, %s40
      %s27 = sphi 0, %s36
      %s28 = sphi 0, %s25
      %s29 = sphi 0, %s26
      %s30 = sphi 0, %s27
      %s31 = sphi 0, %s28
      %s32 = sphi 0, %s29
      %s33 = sphi 0, %s30
      %s51 = sphi 0, %s53
      %s54 = sphi 0, %s51
      %s55 = sphi 0, %s54
      %s71 = sphi 0, %s55
      %s81 = sphi 0, %s83
      %s84 = sphi 0, %s81
      %s85 = sphi 0, %s84
      %s101 = sphi 0, %s85
      %s111 = sphi 0, %s113
      %s114 = sphi 0, %s111
      %s115 = sphi 0, %s114
      %s131 = sphi 0, %s115
      %s139 = sphi 0, %s141
      %s142 = sphi 0, %s139
      %s143 = sphi 0, %s142
      %s159 = sphi 0, %s143
    $region4: #{tpu_custom_call.1} parent=1 // loop_header_branch
      %21 = sbr.rel (%p19) target = $region8
    $region5: #{tpu_custom_call.1} parent=1 // loop_body
      %s23 = ssub.s32 %s18, 1
      %s24 = ssub.s32 %s18, 2
      %s34 = sadd.s32 1, %s27
      %p35 = scmp.ge.s32.totalorder %s34, 1
      %s36 = scalar_select %p35, 0, %s34
      %s37 = sadd.s32 1, %s26
      %s38 = scalar_select %p35, %s37, %s26
      %p39 = scmp.ge.s32.totalorder %s38, 1
      %s40 = scalar_select %p39, 0, %s38
      %s41 = sadd.s32 1, %s25
      %s42 = scalar_select %p39, %s41, %s25
      %p43 = scmp.ge.s32.totalorder %s42, 2
      %s44 = scalar_select %p43, 0, %s42
      %s45 = sadd.s32 %s26, %s27
      %s46 = sadd.s32 %s40, %s36
      %s47 = ssub.s32 %s25, %s44
      %s48 = ssub.s32 %s45, %s46
      %s49 = sor.u32 %s47, %s48
      %p50 = scmp.eq.s32.totalorder %s49, 0
      %s52 = sadd.s32 %s51, 1
      %s53 = scalar_select %p50, %s51, %s52
      %p56 = pneg %p50
      %p57 = scmp.eq.s32.totalorder %s18, 1
      %p58 = por %p56, %p57
      %p59 = scmp.ne.s32.totalorder %s51, %s54
      %p60 = scmp.eq.s32.totalorder %s18, 0
      %p61 = por %p59, %p60
      %p62 = scmp.ne.s32.totalorder %s51, %s54
      %p63 = scmp.eq.s32.totalorder %s23, 1
      %p64 = por %p62, %p63
      %p65 = scmp.ne.s32.totalorder %s54, %s55
      %p66 = scmp.eq.s32.totalorder %s23, 0
      %p67 = por %p65, %p66
      %p68 = scmp.ne.s32.totalorder %s54, %s55
      %p69 = scmp.eq.s32.totalorder %s24, 1
      %p70 = por %p68, %p69
      %p72 = scmp.ne.s32.totalorder %s55, %s71
      %p73 = scmp.eq.s32.totalorder %s24, 0
      %p74 = por %p72, %p73
      %s75 = sadd.s32 %s26, %s27
      %s76 = sadd.s32 %s40, %s36
      %s77 = ssub.s32 %s25, %s44
      %s78 = ssub.s32 %s75, %s76
      %s79 = sor.u32 %s77, %s78
      %p80 = scmp.eq.s32.totalorder %s79, 0
      %s82 = sadd.s32 %s81, 1
      %s83 = scalar_select %p80, %s81, %s82
      %p86 = pneg %p80
      %p87 = scmp.eq.s32.totalorder %s18, 1
      %p88 = por %p86, %p87
      %p89 = scmp.ne.s32.totalorder %s81, %s84
      %p90 = scmp.eq.s32.totalorder %s18, 0
      %p91 = por %p89, %p90
      %p92 = scmp.ne.s32.totalorder %s81, %s84
      %p93 = scmp.eq.s32.totalorder %s23, 1
      %p94 = por %p92, %p93
      %p95 = scmp.ne.s32.totalorder %s84, %s85
      %p96 = scmp.eq.s32.totalorder %s23, 0
      %p97 = por %p95, %p96
      %p98 = scmp.ne.s32.totalorder %s84, %s85
      %p99 = scmp.eq.s32.totalorder %s24, 1
      %p100 = por %p98, %p99
      %p102 = scmp.ne.s32.totalorder %s85, %s101
      %p103 = scmp.eq.s32.totalorder %s24, 0
      %p104 = por %p102, %p103
      %s105 = sadd.s32 %s26, %s27
      %s106 = sadd.s32 %s40, %s36
      %s107 = ssub.s32 %s25, %s44
      %s108 = ssub.s32 %s105, %s106
      %s109 = sor.u32 %s107, %s108
      %p110 = scmp.eq.s32.totalorder %s109, 0
      %s112 = sadd.s32 %s111, 1
      %s113 = scalar_select %p110, %s111, %s112
      %p116 = pneg %p110
      %p117 = scmp.eq.s32.totalorder %s18, 1
      %p118 = por %p116, %p117
      %p119 = scmp.ne.s32.totalorder %s111, %s114
      %p120 = scmp.eq.s32.totalorder %s18, 0
      %p121 = por %p119, %p120
      %p122 = scmp.ne.s32.totalorder %s111, %s114
      %p123 = scmp.eq.s32.totalorder %s23, 1
      %p124 = por %p122, %p123
      %p125 = scmp.ne.s32.totalorder %s114, %s115
      %p126 = scmp.eq.s32.totalorder %s23, 0
      %p127 = por %p125, %p126
      %p128 = scmp.ne.s32.totalorder %s114, %s115
      %p129 = scmp.eq.s32.totalorder %s24, 1
      %p130 = por %p128, %p129
      %p132 = scmp.ne.s32.totalorder %s115, %s131
      %p133 = scmp.eq.s32.totalorder %s24, 0
      %p134 = por %p132, %p133
      %s135 = sadd.s32 %s25, %s26
      %s136 = sadd.s32 %s44, %s40
      %s137 = ssub.s32 %s135, %s136
      %p138 = scmp.eq.s32.totalorder %s137, 0
      %s140 = sadd.s32 %s139, 1
      %s141 = scalar_select %p138, %s139, %s140
      %p144 = pneg %p138
      %p145 = scmp.eq.s32.totalorder %s18, 1
      %p146 = por %p144, %p145
      %p147 = scmp.ne.s32.totalorder %s139, %s142
      %p148 = scmp.eq.s32.totalorder %s18, 0
      %p149 = por %p147, %p148
      %p150 = scmp.ne.s32.totalorder %s139, %s142
      %p151 = scmp.eq.s32.totalorder %s23, 1
      %p152 = por %p150, %p151
      %p153 = scmp.ne.s32.totalorder %s142, %s143
      %p154 = scmp.eq.s32.totalorder %s23, 0
      %p155 = por %p153, %p154
      %p156 = scmp.ne.s32.totalorder %s142, %s143
      %p157 = scmp.eq.s32.totalorder %s24, 1
      %p158 = por %p156, %p157
      %p160 = scmp.ne.s32.totalorder %s143, %s159
      %p161 = scmp.eq.s32.totalorder %s24, 0
      %p162 = por %p160, %p161
      %p163 = scmp.le.s32.totalorder 1, %s18
      %p164 = scmp.lt.s32.totalorder %s18, 3
      %p165 = pnand %p163, %p164
      %p166 = pneg %p165
      // Predicated region
      $region9: #{tpu_custom_call.1} parent=5 // pred_check
        _
      $region10: #{tpu_custom_call.1} parent=5 // pred_check_branch
        %168 = sbr.rel (%p165) target = $region12
      $region11: #{tpu_custom_call.1} parent=5 // pred_region
        %s169 = ssub.s32 %s18, 1
      $region12: #{tpu_custom_call.1} parent=5 // pred_fallthru
        _
      %p170 = scmp.lt.s32.totalorder %s18, 2
      // Predicated region
      $region13: #{tpu_custom_call.1} parent=5 // pred_check
        %p171 = pneg %p170
      $region14: #{tpu_custom_call.1} parent=5 // pred_check_branch
        %173 = sbr.rel (%p171) target = $region16
      $region15: #{tpu_custom_call.1} parent=5 // pred_region
        // Predicated region
        $region17: #{tpu_custom_call.1} parent=15 // pred_check
          %p174 = pneg %p61
        $region18: #{tpu_custom_call.1} parent=15 // pred_check_branch
          %176 = sbr.rel (%p174) target = $region20
        $region19: #{tpu_custom_call.1} parent=15 // pred_region
          %s177 = sand.u32 %s51, 1
          %s178 = scalar_lea.sflag [#allocation3], %s177
          %s179 = sand.u32 %s51, 1
          %s180 = smul.addr %s179, 8
          %s181 = scalar_lea.vmem [#allocation2], %s180
          %s182 = sadd.s32 %s26, %s27
          %s184 = ssub.s32 128, 128
          %185 = vsyncadd %s178, %s184
          %s186 = smul.addr %s25, 4
          %s187 = sadd.s32 %s182, %s186
          %s188 = smul.addr %s187, 32
          %s189 = scalar_lea.hbm %s0, %s188
          %s190 = sshll.u32 %s181, 4
          %s191 = int_to_ptr.vmem [resolvable:$true] %s190
          %196 = dma.hbm_to_vmem [thread:$0]  %s189, 128, %s191, %s178, 32, 32, 2
        $region20: #{tpu_custom_call.1} parent=15 // pred_fallthru
          _
        // Predicated region
        $region21: #{tpu_custom_call.1} parent=15 // pred_check
          %p197 = pneg %p91
        $region22: #{tpu_custom_call.1} parent=15 // pred_check_branch
          %199 = sbr.rel (%p197) target = $region24
        $region23: #{tpu_custom_call.1} parent=15 // pred_region
          %s200 = sand.u32 %s18, 1
          %s201 = scalar_lea.sflag [#allocation6], %s200
          %s202 = sand.u32 %s81, 1
          %s203 = smul.addr %s202, 2
          %s204 = scalar_lea.vmem [#allocation5], %s203
          %s205 = sadd.s32 %s26, %s27
          %s207 = ssub.s32 32, 32
          %208 = vsyncadd %s201, %s207
          %s209 = sadd.s32 %s205, %s25
          %s210 = smul.addr %s209, 32
          %s211 = scalar_lea.hbm %s1, %s210
          %s213 = sshll.u32 %s204, 4
          %s214 = int_to_ptr.vmem [resolvable:$true] %s213
          %216 = dma.hbm_to_vmem [thread:$0]  %s211, 32, %s214, %s201
        $region24: #{tpu_custom_call.1} parent=15 // pred_fallthru
          _
        // Predicated region
        $region25: #{tpu_custom_call.1} parent=15 // pred_check
          %p217 = pneg %p121
        $region26: #{tpu_custom_call.1} parent=15 // pred_check_branch
          %219 = sbr.rel (%p217) target = $region28
        $region27: #{tpu_custom_call.1} parent=15 // pred_region
          %s220 = sand.u32 %s18, 1
          %s221 = scalar_lea.sflag [#allocation6], %s220
          %s222 = sand.u32 %s111, 1
          %s223 = smul.addr %s222, 2
          %s224 = scalar_lea.vmem [#allocation7], %s223
          %s225 = sadd.s32 %s26, %s27
          %s227 = ssub.s32 32, 32
          %228 = vsyncadd %s221, %s227
          %s229 = sadd.s32 %s225, %s25
          %s230 = smul.addr %s229, 32
          %s231 = scalar_lea.hbm %s2, %s230
          %s233 = sshll.u32 %s224, 4
          %s234 = int_to_ptr.vmem [resolvable:$true] %s233
          %236 = dma.hbm_to_vmem [thread:$0]  %s231, 32, %s234, %s221
        $region28: #{tpu_custom_call.1} parent=15 // pred_fallthru
          _
      $region16: #{tpu_custom_call.1} parent=5 // pred_fallthru
        _
      %p237 = scmp.le.s32.totalorder 1, %s18
      %p238 = scmp.lt.s32.totalorder %s18, 3
      %p239 = pnand %p237, %p238
      %p240 = pneg %p239
      // Predicated region
      $region29: #{tpu_custom_call.1} parent=5 // pred_check
        _
      $region30: #{tpu_custom_call.1} parent=5 // pred_check_branch
        %242 = sbr.rel (%p239) target = $region32
      $region31: #{tpu_custom_call.1} parent=5 // pred_region
        %s243 = ssub.s32 %s18, 1
        %s244 = sand.u32 %s54, 1
        %s245 = scalar_lea.sflag [#allocation3], %s244
        %s246 = sand.u32 %s54, 1
        %s247 = smul.addr %s246, 8
        %s248 = scalar_lea.vmem [#allocation2], %s247
        // Predicated region
        $region33: #{tpu_custom_call.1} parent=31 // pred_check
          %p249 = pneg %p67
        $region34: #{tpu_custom_call.1} parent=31 // pred_check_branch
          %251 = sbr.rel (%p249) target = $region36
        $region35: #{tpu_custom_call.1} parent=31 // pred_region
          %252 = dma.done %s245, 128
        $region36: #{tpu_custom_call.1} parent=31 // pred_fallthru
          _
        %s253 = sand.u32 %s23, 1
        %s254 = scalar_lea.sflag [#allocation6], %s253
        %s255 = sand.u32 %s84, 1
        %s256 = smul.addr %s255, 2
        %s257 = scalar_lea.vmem [#allocation5], %s256
        // Predicated region
        $region37: #{tpu_custom_call.1} parent=31 // pred_check
          %p258 = pneg %p97
        $region38: #{tpu_custom_call.1} parent=31 // pred_check_branch
          %260 = sbr.rel (%p258) target = $region40
        $region39: #{tpu_custom_call.1} parent=31 // pred_region
          %261 = dma.done %s254, 32
        $region40: #{tpu_custom_call.1} parent=31 // pred_fallthru
          _
        %s262 = sand.u32 %s23, 1
        %s263 = scalar_lea.sflag [#allocation6], %s262
        %s264 = sand.u32 %s114, 1
        %s265 = smul.addr %s264, 2
        %s266 = scalar_lea.vmem [#allocation7], %s265
        // Predicated region
        $region41: #{tpu_custom_call.1} parent=31 // pred_check
          %p267 = pneg %p127
        $region42: #{tpu_custom_call.1} parent=31 // pred_check_branch
          %269 = sbr.rel (%p267) target = $region44
        $region43: #{tpu_custom_call.1} parent=31 // pred_region
          %270 = dma.done %s263, 32
        $region44: #{tpu_custom_call.1} parent=31 // pred_fallthru
          _
        %s271 = sand.u32 %s54, 1
        %s272 = scalar_lea.sflag [#allocation3], %s271
        %s273 = sand.u32 %s54, 1
        %s274 = smul.addr %s273, 8
        %s275 = scalar_lea.vmem [#allocation2], %s274
        %p276 = pneg %p67
        %p277 = pneg %p64
        %s278 = sand.u32 %s23, 1
        %s279 = scalar_lea.sflag [#allocation6], %s278
        %s280 = sand.u32 %s84, 1
        %s281 = smul.addr %s280, 2
        %s282 = scalar_lea.vmem [#allocation5], %s281
        %p283 = pneg %p97
        %p284 = pneg %p94
        %s285 = sand.u32 %s23, 1
        %s286 = scalar_lea.sflag [#allocation6], %s285
        %s287 = sand.u32 %s114, 1
        %s288 = smul.addr %s287, 2
        %s289 = scalar_lea.vmem [#allocation7], %s288
        %p290 = pneg %p127
        %p291 = pneg %p124
        %p292 = pneg %p155
        %p293 = pneg %p152
        %s294 = sand.u32 %s142, 1
        %s295 = scalar_lea.sflag [#allocation4], %s294
        %s296 = sand.u32 %s142, 1
        %s297 = smul.addr %s296, 26
        %s298 = scalar_lea.vmem [#allocation8], %s297
        %s299 = sadd.s32 %s29, %s30
        %s300 = sadd.s32 %s29, %s30
        %s301 = sadd.s32 %s29, %s30
        %s302 = sadd.s32 %s28, %s29
        %p303 = scmp.eq.s32.totalorder %s30, 0
        // Predicated region
        $region45: #{tpu_custom_call.1} parent=31 // pred_check
          %p304 = pneg %p303
        $region46: #{tpu_custom_call.1} parent=31 // pred_check_branch
          %306 = sbr.rel (%p304) target = $region48
        $region47: #{tpu_custom_call.1} parent=31 // pred_region
          %307 = vst [vmem:[%s298] sm:$0x3] 0.0
          %308 = vst [vmem:[%s298 + $0x2] sm:$0x3] 0.0
          %309 = vst [vmem:[%s298 + $0x4] sm:$0x3] 0.0
          %310 = vst [vmem:[%s298 + $0x6] sm:$0x3] 0.0
          %311 = vst [vmem:[%s298 + $0x8] sm:$0x3] 0.0
          %312 = vst [vmem:[%s298 + $0xa] sm:$0x3] 0.0
          %313 = vst [vmem:[%s298 + $0xc] sm:$0x3] 0.0
          %314 = vst [vmem:[%s298 + $0xe] sm:$0x3] 0.0
          %315 = vst [vmem:[%s298 + $0x10] sm:$0x3] 0.0
          %316 = vst [vmem:[%s298 + $0x12] sm:$0x3] 0.0
          %317 = vst [vmem:[%s298 + $0x14] sm:$0x3] 0.0
          %318 = vst [vmem:[%s298 + $0x16] sm:$0x3] 0.0
          %319 = vst [vmem:[%s298 + $0x18] sm:$0x3] 0.0
        $region48: #{tpu_custom_call.1} parent=31 // pred_fallthru
          _
        %v320 = vld [vmem:[%s257] sm:$0x3]
        %v321 = vld [vmem:[%s266] sm:$0x3]
        %v322 = vld [vmem:[%s248] sm:$0x3]
        %s323 = scalar_lea.vmem %s248, 2 [#allocation2]
        %v324 = vld [vmem:[%s323] sm:$0x3]
        %s325 = scalar_lea.vmem %s248, 4 [#allocation2]
        %v326 = vld [vmem:[%s325] sm:$0x3]
        %s327 = scalar_lea.vmem %s248, 6 [#allocation2]
        %v328 = vld [vmem:[%s327] sm:$0x3]
        %v329 = vmax.f32 %v322, %v324
        %v330 = vmax.f32 %v329, %v326
        %v331 = vmax.f32 %v330, %v328
        %v332 = vsub.f32 %v322, %v331
        %v333 = vmul.f32 %v332, 1.442695
        %v334 = vpow.pop %v333
        %v335 = vsub.f32 %v324, %v331
        %v336 = vmul.f32 %v335, 1.442695
        %v337 = vpow.pop %v336
        %v338 = vsub.f32 %v326, %v331
        %v339 = vmul.f32 %v338, 1.442695
        %v340 = vpow.pop %v339
        %v341 = vsub.f32 %v328, %v331
        %v342 = vmul.f32 %v341, 1.442695
        %v343 = vpow.pop %v342
        %v344 = vadd.f32 %v334, %v337
        %v345 = vadd.f32 %v344, %v340
        %v346 = vadd.f32 %v345, %v343
        %v347 = vrcp.pop %v346
        %v348 = vmul.f32 %v346, %v347
        %v349 = vsub.f32 2.0, %v348
        %v350 = vmul.f32 %v347, %v349
        %vm351 = vcmp.eq.s32.totalorder %v320, 0
        %v352 = vmul.f32 %v334, %v350
        %v353 = vsel %vm351, %v322, 0.0
        %v354 = vadd.f32 %v353, 0.0
        %v355 = vld [vmem:[%s298] sm:$0x3]
        %v356 = vsel %vm351, %v352, 0.0
        %v357 = vadd.f32 %v355, %v356
        %358 = vst [vmem:[%s298] sm:$0x3] %v357
        %s359 = scalar_lea.vmem %s298, 8 [#allocation8]
        %v360 = vld [vmem:[%s359] sm:$0x3]
        %v361 = vadd.f32 %v360, %v352
        %362 = vst [vmem:[%s359] sm:$0x3] %v361
        %s363 = scalar_lea.vmem %s298, 16 [#allocation8]
        %v364 = vld [vmem:[%s363] sm:$0x3]
        %v365 = vsel %vm351, 1, 0
        %v366 = vcvt.s32.f32 %v365
        %v367 = vadd.f32 %v364, %v366
        %368 = vst [vmem:[%s363] sm:$0x3] %v367
        %vm369 = vcmp.eq.s32.totalorder %v320, 1
        %v370 = vmul.f32 %v337, %v350
        %v371 = vsel %vm369, %v324, 0.0
        %v372 = vadd.f32 %v354, %v371
        %s373 = scalar_lea.vmem %s298, 2 [#allocation8]
        %v374 = vld [vmem:[%s373] sm:$0x3]
        %v375 = vsel %vm369, %v370, 0.0
        %v376 = vadd.f32 %v374, %v375
        %377 = vst [vmem:[%s373] sm:$0x3] %v376
        %s378 = scalar_lea.vmem %s298, 10 [#allocation8]
        %v379 = vld [vmem:[%s378] sm:$0x3]
        %v380 = vadd.f32 %v379, %v370
        %381 = vst [vmem:[%s378] sm:$0x3] %v380
        %s382 = scalar_lea.vmem %s298, 18 [#allocation8]
        %v383 = vld [vmem:[%s382] sm:$0x3]
        %v384 = vsel %vm369, 1, 0
        %v385 = vcvt.s32.f32 %v384
        %v386 = vadd.f32 %v383, %v385
        %387 = vst [vmem:[%s382] sm:$0x3] %v386
        %vm388 = vcmp.eq.s32.totalorder %v320, 2
        %v389 = vmul.f32 %v340, %v350
        %v390 = vsel %vm388, %v326, 0.0
        %v391 = vadd.f32 %v372, %v390
        %s392 = scalar_lea.vmem %s298, 4 [#allocation8]
        %v393 = vld [vmem:[%s392] sm:$0x3]
        %v394 = vsel %vm388, %v389, 0.0
        %v395 = vadd.f32 %v393, %v394
        %396 = vst [vmem:[%s392] sm:$0x3] %v395
        %s397 = scalar_lea.vmem %s298, 12 [#allocation8]
        %v398 = vld [vmem:[%s397] sm:$0x3]
        %v399 = vadd.f32 %v398, %v389
        %400 = vst [vmem:[%s397] sm:$0x3] %v399
        %s401 = scalar_lea.vmem %s298, 20 [#allocation8]
        %v402 = vld [vmem:[%s401] sm:$0x3]
        %v403 = vsel %vm388, 1, 0
        %v404 = vcvt.s32.f32 %v403
        %v405 = vadd.f32 %v402, %v404
        %406 = vst [vmem:[%s401] sm:$0x3] %v405
        %vm407 = vcmp.eq.s32.totalorder %v320, 3
        %v408 = vmul.f32 %v343, %v350
        %v409 = vsel %vm407, %v328, 0.0
        %v410 = vadd.f32 %v391, %v409
        %s411 = scalar_lea.vmem %s298, 6 [#allocation8]
        %v412 = vld [vmem:[%s411] sm:$0x3]
        %v413 = vsel %vm407, %v408, 0.0
        %v414 = vadd.f32 %v412, %v413
        %415 = vst [vmem:[%s411] sm:$0x3] %v414
        %s416 = scalar_lea.vmem %s298, 14 [#allocation8]
        %v417 = vld [vmem:[%s416] sm:$0x3]
        %v418 = vadd.f32 %v417, %v408
        %419 = vst [vmem:[%s416] sm:$0x3] %v418
        %s420 = scalar_lea.vmem %s298, 22 [#allocation8]
        %v421 = vld [vmem:[%s420] sm:$0x3]
        %v422 = vsel %vm407, 1, 0
        %v423 = vcvt.s32.f32 %v422
        %v424 = vadd.f32 %v421, %v423
        %425 = vst [vmem:[%s420] sm:$0x3] %v424
        %v426 = vlog2.pop %v346
        %v427 = vmul.f32 %v426, 0.6931472
        %v428 = vadd.f32 %v331, %v427
        %v429 = vsub.f32 %v428, %v410
        %s430 = scalar_lea.vmem %s298, 24 [#allocation8]
        %v431 = vld [vmem:[%s430] sm:$0x3]
        %v432 = vmul.f32 %v429, %v321
        %v433 = vadd.f32 %v431, %v432
        %434 = vst [vmem:[%s430] sm:$0x3] %v433
        %s435 = sand.u32 %s142, 1
        %s436 = scalar_lea.sflag [#allocation4], %s435
        %s437 = sand.u32 %s142, 1
        %s438 = smul.addr %s437, 26
        %s439 = scalar_lea.vmem [#allocation8], %s438
        // Predicated region
        $region49: #{tpu_custom_call.1} parent=31 // pred_check
          %p440 = pneg %p152
        $region50: #{tpu_custom_call.1} parent=31 // pred_check_branch
          %442 = sbr.rel (%p440) target = $region52
        $region51: #{tpu_custom_call.1} parent=31 // pred_region
          %s443 = sadd.s32 %s28, %s29
          %s445 = ssub.s32 416, 416
          %446 = vsyncadd %s436, %s445
          %s447 = smul.addr %s443, 13
          %s448 = smul.addr %s447, 32
          %s449 = scalar_lea.hbm %s3, %s448
          %s450 = sshll.u32 %s439, 4
          %s451 = int_to_ptr.vmem [resolvable:$true] %s450
          %456 = dma.vmem_to_hbm [thread:$0]  %s451, 416, %s449, %s436, 32, 32, 2
        $region52: #{tpu_custom_call.1} parent=31 // pred_fallthru
          _
      $region32: #{tpu_custom_call.1} parent=5 // pred_fallthru
        _
      %p457 = scmp.le.s32.totalorder 2, %s18
      // Predicated region
      $region53: #{tpu_custom_call.1} parent=5 // pred_check
        %p458 = pneg %p457
      $region54: #{tpu_custom_call.1} parent=5 // pred_check_branch
        %460 = sbr.rel (%p458) target = $region56
      $region55: #{tpu_custom_call.1} parent=5 // pred_region
        %s461 = ssub.s32 %s18, 2
        // Predicated region
        $region57: #{tpu_custom_call.1} parent=55 // pred_check
          %p462 = pneg %p158
        $region58: #{tpu_custom_call.1} parent=55 // pred_check_branch
          %464 = sbr.rel (%p462) target = $region60
        $region59: #{tpu_custom_call.1} parent=55 // pred_region
          %s465 = sand.u32 %s143, 1
          %s466 = scalar_lea.sflag [#allocation4], %s465
          %s467 = sand.u32 %s143, 1
          %s468 = smul.addr %s467, 26
          %s469 = scalar_lea.vmem [#allocation8], %s468
          %470 = dma.done %s466, 416
        $region60: #{tpu_custom_call.1} parent=55 // pred_fallthru
          _
      $region56: #{tpu_custom_call.1} parent=5 // pred_fallthru
        _
    $region6: #{tpu_custom_call.1} parent=1 // loop_footer
      %s22 = sadd.s32 1, %s18
    $region7: #{tpu_custom_call.1} parent=1 // loop_footer_branch
      %17 = sbr.rel target = $region3
    $region8: #{tpu_custom_call.1} parent=1 // loop_exit
      _
    %471 = vsyncpa [#allocation3], 1
    %s472 = scalar_lea.sflag [#allocation3], 1
    %473 = vsyncpa %s472, 1
    %474 = vsyncpa [#allocation6], 1
    %s475 = scalar_lea.sflag [#allocation6], 1
    %476 = vsyncpa %s475, 1
    %477 = vsyncpa [#allocation4], 1
    %s478 = scalar_lea.sflag [#allocation4], 1
    %479 = vsyncpa %s478, 1

</llo_original>
